<compile_context>
chip_gen: v5e
topology: v5e:2x2
jax: 0.10.0
libtpu: 0.0.40
codegen_flags: <defaults>
</compile_context>

<pallas_src>
import functools
import math

import jax
import jax.numpy as jnp
from jax import lax
from jax.experimental import pallas as pl
from jax.experimental.pallas import tpu as pltpu


# --------------------------------------------------------------------------- #
# Kernels
# --------------------------------------------------------------------------- #
def _interleave_lanes(even, odd):
    """Interleave two (C, L) arrays along lanes -> (C, 2L): [e0,o0,e1,o1,...]."""
    c, l = even.shape
    return jnp.stack([even, odd], axis=-1).reshape(c, 2 * l)


def _make_conv_kernel(fused: bool):
    """Fused nearest-upsample(x2) + Conv1d(k=3, pad=1) on one batch element."""

    def kernel(x_ref, w_ref, b_ref, out_ref):
        # x_ref: (1, C, L), w_ref: (3, C_out, C_in), b_ref: (C_out, 1)
        # out_ref: (1, C, 2L) if fused else (1, 2, C, L)
        x = x_ref[0]                                   # (C_in, L)
        c, l = x.shape

        y0 = jnp.dot(w_ref[0], x, preferred_element_type=jnp.float32)
        y1 = jnp.dot(w_ref[1], x, preferred_element_type=jnp.float32) + b_ref[...]
        y2 = jnp.dot(w_ref[2], x, preferred_element_type=jnp.float32)

        lane = lax.broadcasted_iota(jnp.int32, (c, l), 1)
        # Y0 shifted right by one column (zero at l == 0),
        # Y2 shifted left by one column (zero at l == L-1).
        # pltpu.roll requires a non-negative shift, so "-1" is written as L-1
        # (cyclic roll, identical mod L).  roll = XLU slot, mask = VPU.
        y0_prev = jnp.where(lane == 0, 0.0, pltpu.roll(y0, 1, axis=1))
        y2_next = jnp.where(lane == l - 1, 0.0, pltpu.roll(y2, l - 1, axis=1))

        y_even = (y0_prev + y1 + y2).astype(out_ref.dtype)
        y_odd = (y0 + y1 + y2_next).astype(out_ref.dtype)

        if fused:
            out_ref[0] = _interleave_lanes(y_even, y_odd)      # (C, 2L), lane-dense
        else:
            out_ref[0, 0] = y_even
            out_ref[0, 1] = y_odd

    return kernel


def _make_upsample_kernel(fused: bool):
    """Nearest-upsample(x2) only (with_conv=False path)."""

    def kernel(x_ref, out_ref):
        x = x_ref[0]
        if fused:
            out_ref[0] = _interleave_lanes(x, x)
        else:
            out_ref[0, 0] = x
            out_ref[0, 1] = x

    return kernel


# --------------------------------------------------------------------------- #
# pallas_call builders + capability probe
# --------------------------------------------------------------------------- #
@functools.lru_cache(maxsize=None)
def _build_call(n, c, l, dtype_name, with_conv, fused):
    dtype = jnp.dtype(dtype_name)

    if fused:
        out_shape = jax.ShapeDtypeStruct((n, c, 2 * l), dtype)
        out_spec = pl.BlockSpec((1, c, 2 * l), lambda i: (i, 0, 0))
    else:
        out_shape = jax.ShapeDtypeStruct((n, 2, c, l), dtype)
        out_spec = pl.BlockSpec((1, 2, c, l), lambda i: (i, 0, 0, 0))

    if with_conv:
        kernel = _make_conv_kernel(fused)
        in_specs = [
            pl.BlockSpec((1, c, l), lambda i: (i, 0, 0)),   # x: one batch element
            pl.BlockSpec((3, c, c), lambda i: (0, 0, 0)),   # taps: resident in VMEM
            pl.BlockSpec((c, 1), lambda i: (0, 0)),         # bias: resident in VMEM
        ]
    else:
        kernel = _make_upsample_kernel(fused)
        in_specs = [pl.BlockSpec((1, c, l), lambda i: (i, 0, 0))]

    return pl.pallas_call(
        kernel,
        out_shape=out_shape,
        grid_spec=pltpu.PrefetchScalarGridSpec(
            num_scalar_prefetch=0,
            grid=(n,),
            in_specs=in_specs,
            out_specs=out_spec,
        ),
        compiler_params=pltpu.CompilerParams(
            dimension_semantics=("parallel",),
            vmem_limit_bytes=32 * 1024 * 1024,
        ),
    )


@functools.lru_cache(maxsize=None)
def _get_forward_fn(n, c, l, dtype_name, with_conv):
    """Return a jitted forward fn; prefers the lane-dense fused-output kernel."""
    dtype = jnp.dtype(dtype_name)
    arg_structs = [jax.ShapeDtypeStruct((n, c, l), dtype)]
    if with_conv:
        arg_structs += [
            jax.ShapeDtypeStruct((3, c, c), dtype),
            jax.ShapeDtypeStruct((c, 1), dtype),
        ]

    # Preferred: kernel writes interleaved (N, C, 2L) directly (no XLA transpose).
    fused_call = _build_call(n, c, l, dtype_name, with_conv, True)
    fused_fn = jax.jit(fused_call)
    try:
        fused_fn.lower(*arg_structs).compile()   # probe Mosaic lane-interleave support
        return fused_fn
    except Exception:
        pass

    # Fallback: phase-split (N, 2, C, L) output + XLA interleave (transpose+reshape).
    split_call = _build_call(n, c, l, dtype_name, with_conv, False)

    def fwd(*args):
        y = split_call(*args)
        return jnp.transpose(y, (0, 2, 3, 1)).reshape(n, c, 2 * l)

    return jax.jit(fwd)


# --------------------------------------------------------------------------- #
# Public forward
# --------------------------------------------------------------------------- #
def upsample_forward(x, weight=None, bias=None, *, with_conv=True):
    """x: (N, C, L). weight: (C, C, 3), bias: (C,) when with_conv. -> (N, C, 2L)."""
    n, c, l = x.shape
    if with_conv:
        assert weight is not None and bias is not None
        w_taps = jnp.transpose(weight, (2, 0, 1)).astype(x.dtype)  # (3, C_out, C_in)
        b2d = bias.reshape(c, 1).astype(x.dtype)
        args = (x, w_taps, b2d)
    else:
        args = (x,)
    fn = _get_forward_fn(n, c, l, jnp.dtype(x.dtype).name, with_conv)
    return fn(*args)


# --------------------------------------------------------------------------- #
# Pure-JAX reference (matches the PyTorch module)
# --------------------------------------------------------------------------- #
def _reference_forward(x, weight, bias, *, with_conv=True):
    x_up = jnp.repeat(x, 2, axis=-1)
    if not with_conv:
        return x_up
    out = lax.conv_general_dilated(
        x_up, weight, window_strides=(1,), padding=[(1, 1)],
        dimension_numbers=("NCH", "OIH", "NCH"))
    return out + bias[None, :, None]


if __name__ == "__main__":
    N, C, L = 2, 4, 16
    key = jax.random.PRNGKey(0)
    kx, kw, kb = jax.random.split(key, 3)

    x = jax.random.normal(kx, (N, C, L), dtype=jnp.float32)

    # Conv1d-default-style init: U(-1/sqrt(fan_in), 1/sqrt(fan_in))
    fan_in = C * 3
    bound = 1.0 / math.sqrt(fan_in)
    weight = jax.random.uniform(kw, (C, C, 3), jnp.float32, -bound, bound)
    bias = jax.random.uniform(kb, (C,), jnp.float32, -bound, bound)

    # with_conv=True path (main)
    out = jax.block_until_ready(upsample_forward(x, weight, bias, with_conv=True))
    ref = _reference_forward(x, weight, bias, with_conv=True)
    assert out.shape == (N, C, 2 * L), out.shape
    assert jnp.allclose(out, ref, atol=1e-5, rtol=1e-5), float(jnp.max(jnp.abs(out - ref)))

    # with_conv=False path
    out_nc = jax.block_until_ready(upsample_forward(x, with_conv=False))
    ref_nc = _reference_forward(x, weight, bias, with_conv=False)
    assert out_nc.shape == (N, C, 2 * L), out_nc.shape
    assert jnp.allclose(out_nc, ref_nc), "upsample-only mismatch"

    print("KERNEL_OK")
</pallas_src>

<mosaic_0001>
module attributes {stable_mosaic.version = 11 : i64} {
  func.func @kernel(%arg0: i32, %arg1: memref<1x4x16xf32, #tpu.memory_space<vmem>>, %arg2: memref<3x4x4xf32, #tpu.memory_space<vmem>>, %arg3: memref<4x1xf32, #tpu.memory_space<vmem>>, %arg4: memref<1x2x4x16xf32, #tpu.memory_space<vmem>>) attributes {dimension_semantics = [#tpu.dimension_semantics<parallel>], iteration_bounds = array<i64: 2>, scalar_prefetch = 0 : i64, scratch_operands = 0 : i64, tpu.core_type = #tpu.core_type<tc>, window_params = [{transform_indices = @transform_0, window_bounds = array<i64: 1, 4, 16>}, {pipeline_mode = #tpu.pipeline_mode<synchronous>, transform_indices = @transform_1, window_bounds = array<i64: 3, 4, 4>}, {pipeline_mode = #tpu.pipeline_mode<synchronous>, transform_indices = @transform_2, window_bounds = array<i64: 4, 1>}, {transform_indices = @transform_3, window_bounds = array<i64: 1, 2, 4, 16>}]} {
    %c0 = arith.constant 0 : index
    %c0_0 = arith.constant 0 : index
    %c0_1 = arith.constant 0 : index
    %0 = vector.load %arg1[%c0, %c0_0, %c0_1] : memref<1x4x16xf32, #tpu.memory_space<vmem>>, vector<1x4x16xf32>
    %1 = vector.shape_cast %0 : vector<1x4x16xf32> to vector<4x16xf32>
    %c0_2 = arith.constant 0 : index
    %c0_3 = arith.constant 0 : index
    %c0_4 = arith.constant 0 : index
    %2 = vector.load %arg2[%c0_2, %c0_3, %c0_4] : memref<3x4x4xf32, #tpu.memory_space<vmem>>, vector<1x4x4xf32>
    %3 = vector.shape_cast %2 : vector<1x4x4xf32> to vector<4x4xf32>
    %cst = arith.constant dense<0.000000e+00> : vector<4x16xf32>
    %4 = tpu.matmul %3, %1, %cst {dimension_numbers = #tpu.dot_dimension_numbers<[1], [0], [0], [1], [0, 0, 1, 1], [], []>} : vector<4x4xf32>, vector<4x16xf32>, vector<4x16xf32> -> vector<4x16xf32>
    %c1 = arith.constant 1 : index
    %c0_5 = arith.constant 0 : index
    %c0_6 = arith.constant 0 : index
    %5 = vector.load %arg2[%c1, %c0_5, %c0_6] : memref<3x4x4xf32, #tpu.memory_space<vmem>>, vector<1x4x4xf32>
    %6 = vector.shape_cast %5 : vector<1x4x4xf32> to vector<4x4xf32>
    %cst_7 = arith.constant dense<0.000000e+00> : vector<4x16xf32>
    %7 = tpu.matmul %6, %1, %cst_7 {dimension_numbers = #tpu.dot_dimension_numbers<[1], [0], [0], [1], [0, 0, 1, 1], [], []>} : vector<4x4xf32>, vector<4x16xf32>, vector<4x16xf32> -> vector<4x16xf32>
    %c0_8 = arith.constant 0 : index
    %c0_9 = arith.constant 0 : index
    %8 = vector.load %arg3[%c0_8, %c0_9] : memref<4x1xf32, #tpu.memory_space<vmem>>, vector<4x1xf32>
    %9 = vector.broadcast %8 : vector<4x1xf32> to vector<4x16xf32>
    %10 = arith.addf %7, %9 : vector<4x16xf32>
    %c2 = arith.constant 2 : index
    %c0_10 = arith.constant 0 : index
    %c0_11 = arith.constant 0 : index
    %11 = vector.load %arg2[%c2, %c0_10, %c0_11] : memref<3x4x4xf32, #tpu.memory_space<vmem>>, vector<1x4x4xf32>
    %12 = vector.shape_cast %11 : vector<1x4x4xf32> to vector<4x4xf32>
    %cst_12 = arith.constant dense<0.000000e+00> : vector<4x16xf32>
    %13 = tpu.matmul %12, %1, %cst_12 {dimension_numbers = #tpu.dot_dimension_numbers<[1], [0], [0], [1], [0, 0, 1, 1], [], []>} : vector<4x4xf32>, vector<4x16xf32>, vector<4x16xf32> -> vector<4x16xf32>
    %14 = tpu.iota {dimensions = array<i32: 1>} : vector<4x16xi32>
    %c0_i32 = arith.constant 0 : i32
    %15 = vector.broadcast %c0_i32 : i32 to vector<4x16xi32>
    %16 = arith.cmpi eq, %14, %15 : vector<4x16xi32>
    %c1_i32 = arith.constant 1 : i32
    %17 = tpu.dynamic_rotate %4 by %c1_i32 dim 1 : vector<4x16xf32>, i32 -> vector<4x16xf32>
    %cst_13 = arith.constant 0.000000e+00 : f32
    %18 = vector.broadcast %cst_13 : f32 to vector<4x16xf32>
    %19 = arith.select %16, %18, %17 : vector<4x16xi1>, vector<4x16xf32>
    %c15_i32 = arith.constant 15 : i32
    %20 = vector.broadcast %c15_i32 : i32 to vector<4x16xi32>
    %21 = arith.cmpi eq, %14, %20 : vector<4x16xi32>
    %c15_i32_14 = arith.constant 15 : i32
    %22 = tpu.dynamic_rotate %13 by %c15_i32_14 dim 1 : vector<4x16xf32>, i32 -> vector<4x16xf32>
    %cst_15 = arith.constant 0.000000e+00 : f32
    %23 = vector.broadcast %cst_15 : f32 to vector<4x16xf32>
    %24 = arith.select %21, %23, %22 : vector<4x16xi1>, vector<4x16xf32>
    %25 = arith.addf %19, %10 : vector<4x16xf32>
    %26 = arith.addf %25, %13 : vector<4x16xf32>
    %27 = arith.addf %4, %10 : vector<4x16xf32>
    %28 = arith.addf %27, %24 : vector<4x16xf32>
    %c0_16 = arith.constant 0 : index
    %c0_17 = arith.constant 0 : index
    %c0_18 = arith.constant 0 : index
    %c0_19 = arith.constant 0 : index
    %29 = vector.load %arg4[%c0_16, %c0_17, %c0_18, %c0_19] : memref<1x2x4x16xf32, #tpu.memory_space<vmem>>, vector<1x1x4x16xf32>
    %30 = vector.shape_cast %29 : vector<1x1x4x16xf32> to vector<4x16xf32>
    %31 = vector.shape_cast %26 : vector<4x16xf32> to vector<1x1x4x16xf32>
    tpu.vector_store %arg4[%c0_16, %c0_17, %c0_18, %c0_19], %31 {strides = array<i32>} : memref<1x2x4x16xf32, #tpu.memory_space<vmem>>, vector<1x1x4x16xf32>,
    %c0_20 = arith.constant 0 : index
    %c1_21 = arith.constant 1 : index
    %c0_22 = arith.constant 0 : index
    %c0_23 = arith.constant 0 : index
    %32 = vector.load %arg4[%c0_20, %c1_21, %c0_22, %c0_23] : memref<1x2x4x16xf32, #tpu.memory_space<vmem>>, vector<1x1x4x16xf32>
    %33 = vector.shape_cast %32 : vector<1x1x4x16xf32> to vector<4x16xf32>
    %34 = vector.shape_cast %28 : vector<4x16xf32> to vector<1x1x4x16xf32>
    tpu.vector_store %arg4[%c0_20, %c1_21, %c0_22, %c0_23], %34 {strides = array<i32>} : memref<1x2x4x16xf32, #tpu.memory_space<vmem>>, vector<1x1x4x16xf32>,
    return
  }
  func.func @transform_0(%arg0: i32) -> (i32, i32, i32) {
    %c0_i32 = arith.constant 0 : i32
    %c0_i32_0 = arith.constant 0 : i32
    %c0_i32_1 = arith.constant 0 : i32
    return %arg0, %c0_i32, %c0_i32_0 : i32, i32, i32
  }
  func.func @transform_1(%arg0: i32) -> (i32, i32, i32) {
    %c0_i32 = arith.constant 0 : i32
    %c0_i32_0 = arith.constant 0 : i32
    %c0_i32_1 = arith.constant 0 : i32
    %c0_i32_2 = arith.constant 0 : i32
    return %c0_i32, %c0_i32_0, %c0_i32_1 : i32, i32, i32
  }
  func.func @transform_2(%arg0: i32) -> (i32, i32) {
    %c0_i32 = arith.constant 0 : i32
    %c0_i32_0 = arith.constant 0 : i32
    %c0_i32_1 = arith.constant 0 : i32
    return %c0_i32, %c0_i32_0 : i32, i32
  }
  func.func @transform_3(%arg0: i32) -> (i32, i32, i32, i32) {
    %c0_i32 = arith.constant 0 : i32
    %c0_i32_0 = arith.constant 0 : i32
    %c0_i32_1 = arith.constant 0 : i32
    %c0_i32_2 = arith.constant 0 : i32
    return %arg0, %c0_i32, %c0_i32_0, %c0_i32_1 : i32, i32, i32, i32
  }
}

</mosaic_0001>

<llo_original>
// kernel: fwd.1
$region0: #{fwd.1}
  #allocation0 [shape = 'u32[]', space=smem, size = 0x4, offset = 0x4, fixed_abs, tag = 'smem constant byte address 0x4 - core index']
  #allocation1 [shape = 'u32[72,128]{1,0:T(1,128)}', space=vmem, size = 0x9000, scoped, tag = 'internal scratch']
  %s0 = inlined_call_operand.hbm [shape: f32[2,4,16], index: 0, kind: input, shape index: {}]
  %s1 = inlined_call_operand.hbm [shape: f32[3,4,4], index: 1, kind: input, shape index: {}]
  %s2 = inlined_call_operand.vmem [shape: f32[4,1], index: 2, kind: input, shape index: {}]
  %s3 = inlined_call_operand.vmem [shape: f32[2,2,4,16], index: 3, kind: output, shape index: {}]
  %s4 = sld [smem:[#allocation0]]
  $region53: #{fwd.1} parent=0
    _
  %s6 = ssub.s32 1, %s4
  %s7 = scalar_select 0, %s6, %s4
  $region1: #{fwd.1} parent=0
    #allocation2 [shape = 'u8[4096]{0}', space=vmem, size = 0x1000, scoped, tag = 'input window, operand 0']
    #allocation3 [shape = 's32[2]{0}', space=sflag, size = 0x8, scoped, tag = 'scoped memory for fwd.1']
    #allocation4 [shape = 'u8[6144]{0}', space=vmem, size = 0x1800, scoped, tag = 'input window, operand 1, single buffered']
    #allocation5 [shape = 's32[1]{0}', space=sflag, size = 0x4, scoped, tag = 'scoped memory for fwd.1']
    %8 = vsyncpa [#allocation3], 0
    %s9 = scalar_lea.sflag [#allocation3], 1
    %10 = vsyncpa %s9, 0
    %11 = vsyncpa [#allocation5], 0
    loop: start=0, step=1, limit=4
    $region2: #{fwd.1} parent=1 // loop_pre_header
      _
    $region3: #{fwd.1} parent=1 // loop_header
      %s13 = sphi 0, %s17
      %p14 = scmp.ge.s32.totalorder %s13, 4
      %s23 = sphi 0, %s25
      %s26 = sphi 0, %s23
      %s27 = sphi 0, %s26
      %s43 = sphi 0, %s27
      %s47 = sphi 0, %s47
      %s49 = sphi 0, %s47
      %s50 = sphi 0, %s49
      %s64 = sphi 0, %s50
      %s68 = sphi 0, %s68
      %s70 = sphi 0, %s68
      %s71 = sphi 0, %s70
      %s85 = sphi 0, %s71
      %s91 = sphi 0, %s93
      %s94 = sphi 0, %s91
      %s95 = sphi 0, %s94
      %s111 = sphi 0, %s95
    $region4: #{fwd.1} parent=1 // loop_header_branch
      %16 = sbr.rel (%p14) target = $region8
    $region5: #{fwd.1} parent=1 // loop_body
      %s18 = ssub.s32 %s13, 1
      %s19 = ssub.s32 %s13, 2
      %s20 = sadd.s32 %s13, 1
      %s21 = ssub.s32 %s13, %s20
      %p22 = scmp.eq.s32.totalorder %s21, 0
      %s24 = sadd.s32 %s23, 1
      %s25 = scalar_select %p22, %s23, %s24
      %p28 = pneg %p22
      %p29 = scmp.eq.s32.totalorder %s13, 1
      %p30 = por %p28, %p29
      %p31 = scmp.ne.s32.totalorder %s23, %s26
      %p32 = scmp.eq.s32.totalorder %s13, 0
      %p33 = por %p31, %p32
      %p34 = scmp.ne.s32.totalorder %s23, %s26
      %p35 = scmp.eq.s32.totalorder %s18, 1
      %p36 = por %p34, %p35
      %p37 = scmp.ne.s32.totalorder %s26, %s27
      %p38 = scmp.eq.s32.totalorder %s18, 0
      %p39 = por %p37, %p38
      %p40 = scmp.ne.s32.totalorder %s26, %s27
      %p41 = scmp.eq.s32.totalorder %s19, 1
      %p42 = por %p40, %p41
      %p44 = scmp.ne.s32.totalorder %s27, %s43
      %p45 = scmp.eq.s32.totalorder %s19, 0
      %p46 = por %p44, %p45
      %s48 = sadd.s32 %s47, 1
      %p51 = scmp.eq.s32.totalorder %s13, 1
      %p52 = scmp.ne.s32.totalorder %s47, %s49
      %p53 = scmp.eq.s32.totalorder %s13, 0
      %p54 = por %p52, %p53
      %p55 = scmp.ne.s32.totalorder %s47, %s49
      %p56 = scmp.eq.s32.totalorder %s18, 1
      %p57 = por %p55, %p56
      %p58 = scmp.ne.s32.totalorder %s49, %s50
      %p59 = scmp.eq.s32.totalorder %s18, 0
      %p60 = por %p58, %p59
      %p61 = scmp.ne.s32.totalorder %s49, %s50
      %p62 = scmp.eq.s32.totalorder %s19, 1
      %p63 = por %p61, %p62
      %p65 = scmp.ne.s32.totalorder %s50, %s64
      %p66 = scmp.eq.s32.totalorder %s19, 0
      %p67 = por %p65, %p66
      %s69 = sadd.s32 %s68, 1
      %p72 = scmp.eq.s32.totalorder %s13, 1
      %p73 = scmp.ne.s32.totalorder %s68, %s70
      %p74 = scmp.eq.s32.totalorder %s13, 0
      %p75 = por %p73, %p74
      %p76 = scmp.ne.s32.totalorder %s68, %s70
      %p77 = scmp.eq.s32.totalorder %s18, 1
      %p78 = por %p76, %p77
      %p79 = scmp.ne.s32.totalorder %s70, %s71
      %p80 = scmp.eq.s32.totalorder %s18, 0
      %p81 = por %p79, %p80
      %p82 = scmp.ne.s32.totalorder %s70, %s71
      %p83 = scmp.eq.s32.totalorder %s19, 1
      %p84 = por %p82, %p83
      %p86 = scmp.ne.s32.totalorder %s71, %s85
      %p87 = scmp.eq.s32.totalorder %s19, 0
      %p88 = por %p86, %p87
      %s89 = ssub.s32 %s13, %s20
      %p90 = scmp.eq.s32.totalorder %s89, 0
      %s92 = sadd.s32 %s91, 1
      %s93 = scalar_select %p90, %s91, %s92
      %p96 = pneg %p90
      %p97 = scmp.eq.s32.totalorder %s13, 1
      %p98 = por %p96, %p97
      %p99 = scmp.ne.s32.totalorder %s91, %s94
      %p100 = scmp.eq.s32.totalorder %s13, 0
      %p101 = por %p99, %p100
      %p102 = scmp.ne.s32.totalorder %s91, %s94
      %p103 = scmp.eq.s32.totalorder %s18, 1
      %p104 = por %p102, %p103
      %p105 = scmp.ne.s32.totalorder %s94, %s95
      %p106 = scmp.eq.s32.totalorder %s18, 0
      %p107 = por %p105, %p106
      %p108 = scmp.ne.s32.totalorder %s94, %s95
      %p109 = scmp.eq.s32.totalorder %s19, 1
      %p110 = por %p108, %p109
      %p112 = scmp.ne.s32.totalorder %s95, %s111
      %p113 = scmp.eq.s32.totalorder %s19, 0
      %p114 = por %p112, %p113
      %p115 = scmp.le.s32.totalorder 1, %s13
      %p116 = scmp.lt.s32.totalorder %s13, 3
      %p117 = pnand %p115, %p116
      %p118 = pneg %p117
      // Predicated region
      $region9: #{fwd.1} parent=5 // pred_check
        _
      $region10: #{fwd.1} parent=5 // pred_check_branch
        %120 = sbr.rel (%p117) target = $region12
      $region11: #{fwd.1} parent=5 // pred_region
        %s121 = ssub.s32 %s13, 1
        // Predicated region
        $region13: #{fwd.1} parent=11 // pred_check
          %p122 = pneg %p60
        $region14: #{fwd.1} parent=11 // pred_check_branch
          %124 = sbr.rel (%p122) target = $region16
        $region15: #{fwd.1} parent=11 // pred_region
          %126 = vsyncadd [#allocation5], 0
          %s127 = sshll.u32 %s1, 4
          %s128 = int_to_ptr.hbm [resolvable:$true] %s127
          %s129 = sshll.u32 [#allocation4], 4
          %s130 = int_to_ptr.vmem [resolvable:$true] %s129
          %135 = dma.hbm_to_vmem [thread:$0]  %s128, 192, %s130, [#allocation5], 64, 64, 4
        $region16: #{fwd.1} parent=11 // pred_fallthru
          _
        // Predicated region
        $region17: #{fwd.1} parent=11 // pred_check
          %p136 = pneg %p81
        $region18: #{fwd.1} parent=11 // pred_check_branch
          %138 = sbr.rel (%p136) target = $region20
        $region19: #{fwd.1} parent=11 // pred_region
          _
        $region20: #{fwd.1} parent=11 // pred_fallthru
          _
      $region12: #{fwd.1} parent=5 // pred_fallthru
        _
      %p139 = scmp.lt.s32.totalorder %s13, 2
      // Predicated region
      $region21: #{fwd.1} parent=5 // pred_check
        %p140 = pneg %p139
      $region22: #{fwd.1} parent=5 // pred_check_branch
        %142 = sbr.rel (%p140) target = $region24
      $region23: #{fwd.1} parent=5 // pred_region
        // Predicated region
        $region25: #{fwd.1} parent=23 // pred_check
          %p143 = pneg %p33
        $region26: #{fwd.1} parent=23 // pred_check_branch
          %145 = sbr.rel (%p143) target = $region28
        $region27: #{fwd.1} parent=23 // pred_region
          %s146 = sand.u32 %s23, 1
          %s147 = scalar_lea.sflag [#allocation3], %s146
          %s148 = sand.u32 %s23, 1
          %s149 = smul.addr %s148, 4
          %s150 = scalar_lea.vmem [#allocation2], %s149
          %152 = vsyncadd %s147, 0
          %s153 = smul.addr %s13, 4
          %s154 = scalar_lea.hbm %s0, %s153
          %s156 = sshll.u32 %s154, 4
          %s157 = int_to_ptr.hbm [resolvable:$true] %s156
          %s158 = sshll.u32 %s150, 4
          %s159 = int_to_ptr.vmem [resolvable:$true] %s158
          %161 = dma.hbm_to_vmem [thread:$0]  %s157, 64, %s159, %s147
        $region28: #{fwd.1} parent=23 // pred_fallthru
          _
      $region24: #{fwd.1} parent=5 // pred_fallthru
        _
      %p162 = scmp.le.s32.totalorder 1, %s13
      %p163 = scmp.lt.s32.totalorder %s13, 3
      %p164 = pnand %p162, %p163
      %p165 = pneg %p164
      // Predicated region
      $region29: #{fwd.1} parent=5 // pred_check
        _
      $region30: #{fwd.1} parent=5 // pred_check_branch
        %167 = sbr.rel (%p164) target = $region32
      $region31: #{fwd.1} parent=5 // pred_region
        %s168 = ssub.s32 %s13, 1
        %s169 = sand.u32 %s26, 1
        %s170 = scalar_lea.sflag [#allocation3], %s169
        %s171 = sand.u32 %s26, 1
        %s172 = smul.addr %s171, 4
        %s173 = scalar_lea.vmem [#allocation2], %s172
        // Predicated region
        $region33: #{fwd.1} parent=31 // pred_check
          %p174 = pneg %p39
        $region34: #{fwd.1} parent=31 // pred_check_branch
          %176 = sbr.rel (%p174) target = $region36
        $region35: #{fwd.1} parent=31 // pred_region
          %178 = dma.done %s170, 64
        $region36: #{fwd.1} parent=31 // pred_fallthru
          _
        // Predicated region
        $region37: #{fwd.1} parent=31 // pred_check
          %p179 = pneg %p60
        $region38: #{fwd.1} parent=31 // pred_check_branch
          %181 = sbr.rel (%p179) target = $region40
        $region39: #{fwd.1} parent=31 // pred_region
          %183 = dma.done [#allocation5], 192
        $region40: #{fwd.1} parent=31 // pred_fallthru
          _
        %s184 = sand.u32 %s26, 1
        %s185 = scalar_lea.sflag [#allocation3], %s184
        %s186 = sand.u32 %s26, 1
        %s187 = smul.addr %s186, 4
        %s188 = scalar_lea.vmem [#allocation2], %s187
        %p189 = pneg %p39
        %p190 = pneg %p36
        %p191 = pneg %p60
        %p192 = pneg %p57
        %p193 = pneg %p81
        %p194 = pneg %p78
        %p195 = pneg %p107
        %p196 = pneg %p104
        %p197 = scmp.lt.s32.totalorder %s18, 1
        %s198 = scalar_select %p197, %s18, 1
        %s199 = smul.addr %s198, 2
        %s200 = smul.addr %s199, 4
        %s201 = scalar_lea.vmem %s3, %s200
        %p202 = scmp.lt.s32.totalorder %s18, 1
        %s203 = scalar_select %p202, %s18, 1
        %s204 = smul.addr %s203, 2
        %s205 = smul.addr %s204, 4
        %s206 = scalar_lea.vmem %s3, %s205
        %v207 = vld [vmem:[%s173] sm:$0xf]
        %v208 = vld [vmem:[#allocation4] sm:$0xf]
        %vm209 = vcmask 31744
        %v211 = vsel %vm209, %v208, 0
        %vm213 = vcmask 1043456
        %v215 = vsel %vm213, %v207, 0
        %217 = vmatpush.msra.mxu0 0.0
        %218 = vmatpush.msra.mxu0 0.0
        %219 = vmatpush.msra.mxu0 0.0
        %220 = vmatpush.msra.mxu0 0.0
        %221 = vmatpush.msra.mxu0 0.0
        %222 = vmatpush.msra.mxu0 0.0
        %223 = vmatpush.msra.mxu0 0.0
        %224 = vmatpush.msra.mxu0 0.0
        %225 = vmatpush.msra.mxu0 0.0
        %226 = vmatpush.msra.mxu0 0.0
        %227 = vmatpush.msra.mxu0 0.0
        %228 = vmatpush.msra.mxu0 0.0
        %229 = vmatpush.msra.mxu0 0.0
        %230 = vmatpush.msra.mxu0 0.0
        %231 = vmatpush.msra.mxu0 0.0
        %232 = vmatpush.msra.mxu0 %v215
        %233 = vmatmul.f32.gmra.mxu0 %v211
        %v234 = vpop.f32.mrf.mxu0
        %v235 = vadd.f32 0.0, %v234
        %236 = vdwg.mxu0
        %s237 = scalar_lea.vmem [#allocation4], 4
        %v238 = vld [vmem:[%s237] sm:$0xf]
        %v239 = vld [vmem:[%s2] sm:$0xf]
        %241 = vset.pattern.permute.xlu0 0
        %242 = vperm.xlu0 %241, %v239
        %v243 = vpop.permute.xlu0 %242
        %v246 = vsel %vm209, %v238, 0
        %248 = vmatpush.msra.mxu0 0.0
        %249 = vmatpush.msra.mxu0 0.0
        %250 = vmatpush.msra.mxu0 0.0
        %251 = vmatpush.msra.mxu0 0.0
        %252 = vmatpush.msra.mxu0 0.0
        %253 = vmatpush.msra.mxu0 0.0
        %254 = vmatpush.msra.mxu0 0.0
        %255 = vmatpush.msra.mxu0 0.0
        %256 = vmatpush.msra.mxu0 0.0
        %257 = vmatpush.msra.mxu0 0.0
        %258 = vmatpush.msra.mxu0 0.0
        %259 = vmatpush.msra.mxu0 0.0
        %260 = vmatpush.msra.mxu0 0.0
        %261 = vmatpush.msra.mxu0 0.0
        %262 = vmatpush.msra.mxu0 0.0
        %263 = vmatpush.msra.mxu0 %v215
        %264 = vmatmul.f32.gmra.mxu0 %v246
        %v265 = vpop.f32.mrf.mxu0
        %v266 = vadd.f32 %v243, %v265
        %267 = vdwg.mxu0
        %s268 = scalar_lea.vmem [#allocation4], 8
        %v269 = vld [vmem:[%s268] sm:$0xf]
        %v271 = vsel %vm209, %v269, 0
        %273 = vmatpush.msra.mxu0 0.0
        %274 = vmatpush.msra.mxu0 0.0
        %275 = vmatpush.msra.mxu0 0.0
        %276 = vmatpush.msra.mxu0 0.0
        %277 = vmatpush.msra.mxu0 0.0
        %278 = vmatpush.msra.mxu0 0.0
        %279 = vmatpush.msra.mxu0 0.0
        %280 = vmatpush.msra.mxu0 0.0
        %281 = vmatpush.msra.mxu0 0.0
        %282 = vmatpush.msra.mxu0 0.0
        %283 = vmatpush.msra.mxu0 0.0
        %284 = vmatpush.msra.mxu0 0.0
        %285 = vmatpush.msra.mxu0 0.0
        %286 = vmatpush.msra.mxu0 0.0
        %287 = vmatpush.msra.mxu0 0.0
        %288 = vmatpush.msra.mxu0 %v215
        %289 = vmatmul.f32.gmra.mxu0 %v271
        %v290 = vpop.f32.mrf.mxu0
        %v291 = vadd.f32 0.0, %v290
        %292 = vdwg.mxu0
        %v293 = vlaneseq
        %v294 = vand.u32 %v293, 127
        %vm295 = vcmp.eq.s32.totalorder %v294, 0
        %vm296 = vcmask 1047680
        %297 = vrot.lane.b32.xlu0 %v235, 16
        %v298 = vpop.permute.xlu0 %297
        %v299 = vsel %vm296, %v298, %v235
        %300 = vrot.lane.b32.xlu0 %v299, 16
        %v301 = vpop.permute.xlu0 %300
        %v302 = vsel %vm296, %v301, %v235
        %304 = vrot.lane.b32.xlu0 %v302, 113
        %v305 = vpop.permute.xlu0 %304
        %v307 = vsel %vm295, 0.0, %v305
        %vm308 = vcmp.eq.s32.totalorder %v294, 15
        %309 = vrot.lane.b32.xlu0 %v291, 16
        %v310 = vpop.permute.xlu0 %309
        %v311 = vsel %vm296, %v310, %v291
        %312 = vrot.lane.b32.xlu0 %v311, 16
        %v313 = vpop.permute.xlu0 %312
        %v314 = vsel %vm296, %v313, %v291
        %316 = vrot.lane.b32.xlu0 %v314, 127
        %v317 = vpop.permute.xlu0 %316
        %v319 = vsel %vm308, 0.0, %v317
        %v320 = vadd.f32 %v307, %v266
        %v321 = vadd.f32 %v320, %v291
        %v322 = vadd.f32 %v235, %v266
        %v323 = vadd.f32 %v322, %v319
        %vm324 = vcmask 125952
        %325 = vst.msk [vmem:[%s206] sm:$0xf] %vm324, %v321
        %s326 = scalar_lea.vmem %s206, 4
        %327 = vst.msk [vmem:[%s326] sm:$0xf] %vm324, %v323
        %p328 = scmp.lt.s32.totalorder %s18, 1
        %s329 = scalar_select %p328, %s18, 1
        %s330 = smul.addr %s329, 2
        %s331 = smul.addr %s330, 4
        %s332 = scalar_lea.vmem %s3, %s331
        // Predicated region
        $region41: #{fwd.1} parent=31 // pred_check
          %p333 = pneg %p104
        $region42: #{fwd.1} parent=31 // pred_check_branch
          %335 = sbr.rel (%p333) target = $region44
        $region43: #{fwd.1} parent=31 // pred_region
          _
        $region44: #{fwd.1} parent=31 // pred_fallthru
          _
      $region32: #{fwd.1} parent=5 // pred_fallthru
        _
      %p336 = scmp.le.s32.totalorder 2, %s13
      // Predicated region
      $region45: #{fwd.1} parent=5 // pred_check
        %p337 = pneg %p336
      $region46: #{fwd.1} parent=5 // pred_check_branch
        %339 = sbr.rel (%p337) target = $region48
      $region47: #{fwd.1} parent=5 // pred_region
        %s340 = ssub.s32 %s13, 2
        // Predicated region
        $region49: #{fwd.1} parent=47 // pred_check
          %p341 = pneg %p110
        $region50: #{fwd.1} parent=47 // pred_check_branch
          %343 = sbr.rel (%p341) target = $region52
        $region51: #{fwd.1} parent=47 // pred_region
          %p344 = scmp.lt.s32.totalorder %s19, 1
          %s345 = scalar_select %p344, %s19, 1
          %s346 = smul.addr %s345, 2
          %s347 = smul.addr %s346, 4
          %s348 = scalar_lea.vmem %s3, %s347
        $region52: #{fwd.1} parent=47 // pred_fallthru
          _
      $region48: #{fwd.1} parent=5 // pred_fallthru
        _
    $region6: #{fwd.1} parent=1 // loop_footer
      %s17 = sadd.s32 1, %s13
    $region7: #{fwd.1} parent=1 // loop_footer_branch
      %12 = sbr.rel target = $region3
    $region8: #{fwd.1} parent=1 // loop_exit
      _
    %349 = vsyncpa [#allocation3], 1
    %s350 = scalar_lea.sflag [#allocation3], 1
    %351 = vsyncpa %s350, 1
    %352 = vsyncpa [#allocation5], 1

</llo_original>
